<compile_context>
chip_gen: v6e
topology: v6e:2x2x1
jax: 0.10.0
libtpu: 0.0.40
codegen_flags: <defaults>
</compile_context>

<pallas_src>
import jax
import jax.numpy as jnp
from jax.experimental import pallas as pl
from jax.experimental.pallas import tpu as pltpu


def _round_up(x, m):
    return (x + m - 1) // m * m


# ---------------------------------------------------------------------------
# Kernel 1a: embedding gather, small-table fast path (table resident in VMEM)
# ---------------------------------------------------------------------------
def _gather_vmem_kernel(idx_ref, emb_ref, e_ref):
    # idx_ref : (B,)          int32  SMEM
    # emb_ref : (V_rows,E_pad) f32   VMEM (whole table, one bulk DMA)
    # e_ref   : (B, E_pad)     f32   VMEM output
    for i in range(e_ref.shape[0]):  # B is small & static -> unrolled
        e_ref[i, :] = emb_ref[idx_ref[i], :]


# ---------------------------------------------------------------------------
# Kernel 1b: embedding gather, large-table path (per-row DMAs from HBM)
# ---------------------------------------------------------------------------
def _gather_dma_kernel(idx_ref, emb_hbm, e_ref, sems):
    # idx_ref : (B,)           int32 SMEM (pre-clamped in the wrapper)
    # emb_hbm : (V_rows,E_pad) f32   HBM (pl.ANY) -- never copied wholesale
    # e_ref   : (B, E_pad)     f32   VMEM output
    B = e_ref.shape[0]
    copies = []
    for i in range(B):  # issue all row DMAs, then wait
        cp = pltpu.make_async_copy(
            emb_hbm.at[pl.ds(idx_ref[i], 1)],   # (1, E_pad) row in HBM
            e_ref.at[pl.ds(i, 1)],              # (1, E_pad) row in VMEM
            sems.at[i],
        )
        cp.start()
        copies.append(cp)
    for cp in copies:
        cp.wait()
    # TODO(synk): for large B, switch to a pipelined pl.Element(1) row gather
    # (PrefetchScalarGridSpec) so row i+1 streams behind row i instead of
    # holding B outstanding descriptors.


# ---------------------------------------------------------------------------
# Kernel 2: tiled linear  logits[:, tile_j] = e @ Wt[:, tile_j] + b[tile_j]
#           (bf16 weights / activations, f32 accumulation, f32 bias & output)
# ---------------------------------------------------------------------------
def _linear_kernel(e_ref, wt_ref, b_ref, out_ref):
    acts = e_ref[...].astype(wt_ref.dtype)
    out_ref[...] = (
        jnp.dot(acts, wt_ref[...], preferred_element_type=jnp.float32)
        + b_ref[...]
    ).astype(out_ref.dtype)


# ---------------------------------------------------------------------------
# One-time parameter preparation (transpose + pad + quantize OUTSIDE hot path)
# ---------------------------------------------------------------------------
def prepare_params(
    emb, w, b, *,
    weight_dtype=jnp.bfloat16,
    lane=128, mxu_n=256,
    vmem_tile_budget_bytes=16 * 1024 * 1024,   # working-set target for W^T/out tiles
    small_table_bytes=2 * 1024 * 1024,
):
    """emb: (V, E); w: (V, E) PyTorch Linear layout; b: (V,)."""
    V, E = emb.shape
    E_pad = _round_up(E, lane)                      # aligned contraction dim (K)
    w_itemsize = jnp.dtype(weight_dtype).itemsize

    # Lane-dense, MXU-aligned vocab tile sized from the VMEM budget:
    # 2x (double-buffered) weight tile + 2x output tile + bias per column.
    per_col_bytes = 2 * E_pad * w_itemsize + 2 * 8 * 4 + 2 * 4
    TV = max(mxu_n, (vmem_tile_budget_bytes // per_col_bytes) // mxu_n * mxu_n)
    TV = min(TV, 16384)                             # multi-MiB but bounded
    TV = min(TV, _round_up(V, mxu_n))
    V_pad = _round_up(V, TV)

    V_rows = _round_up(V, 8)                        # sublane-align table rows
    emb_p = (jnp.zeros((V_rows, E_pad), jnp.float32)
             .at[:V, :E].set(emb.astype(jnp.float32)))          # f32: `e` is exact
    wt_p = (jnp.zeros((E_pad, V_pad), weight_dtype)
            .at[:E, :V].set(w.T.astype(weight_dtype)))          # bf16 W^T stream
    b_p = jnp.zeros((1, V_pad), jnp.float32).at[0, :V].set(b.astype(jnp.float32))

    dims = dict(V=V, E=E, E_pad=E_pad, V_pad=V_pad, TV=TV,
                small_table=(V_rows * E_pad * 4 <= small_table_bytes))
    return (emb_p, wt_p, b_p), dims


def word2vec_forward(x, params, dims):
    emb_p, wt_p, b_p = params
    V, E, E_pad, V_pad, TV = (dims[k] for k in ("V", "E", "E_pad", "V_pad", "TV"))
    B = x.shape[0]

    # PyTorch raises on out-of-range ids; we clamp once (no bound check in DMA).
    idx = jnp.clip(x.astype(jnp.int32), 0, V - 1)

    # --- embedding gather ----------------------------------------------------
    if dims["small_table"]:
        e_pad = pl.pallas_call(
            _gather_vmem_kernel,
            out_shape=jax.ShapeDtypeStruct((B, E_pad), jnp.float32),
            in_specs=[
                pl.BlockSpec(memory_space=pltpu.MemorySpace.SMEM),   # token ids
                pl.BlockSpec(memory_space=pltpu.MemorySpace.VMEM),   # whole table
            ],
            out_specs=pl.BlockSpec(memory_space=pltpu.MemorySpace.VMEM),
        )(idx, emb_p)
    else:
        e_pad = pl.pallas_call(
            _gather_dma_kernel,
            out_shape=jax.ShapeDtypeStruct((B, E_pad), jnp.float32),
            in_specs=[
                pl.BlockSpec(memory_space=pltpu.MemorySpace.SMEM),   # token ids
                pl.BlockSpec(memory_space=pl.ANY),                   # HBM table
            ],
            out_specs=pl.BlockSpec(memory_space=pltpu.MemorySpace.VMEM),
            scratch_shapes=[pltpu.SemaphoreType.DMA((B,))],
        )(idx, emb_p)

    # --- linear, tiled over the vocab dimension -------------------------------
    n_tiles = V_pad // TV
    w_itemsize = jnp.dtype(wt_p.dtype).itemsize
    cost = pl.CostEstimate(
        flops=2 * B * E_pad * V_pad,
        bytes_accessed=(E_pad * V_pad * w_itemsize     # streamed W^T
                        + B * V_pad * 4                # logits out
                        + B * E_pad * 4                # activations
                        + V_pad * 4),                  # bias
        transcendentals=0,
    )
    logits_pad = pl.pallas_call(
        _linear_kernel,
        out_shape=jax.ShapeDtypeStruct((B, V_pad), jnp.float32),
        grid=(n_tiles,),
        in_specs=[
            pl.BlockSpec((B, E_pad), lambda j: (0, 0)),    # resident activation
            pl.BlockSpec((E_pad, TV), lambda j: (0, j)),   # streamed bf16 W^T tiles
            pl.BlockSpec((1, TV), lambda j: (0, j)),       # streamed bias tiles
        ],
        out_specs=pl.BlockSpec((B, TV), lambda j: (0, j)),  # lane-dense output
        compiler_params=pltpu.CompilerParams(
            dimension_semantics=("parallel",),   # shard vocab tiles over TCs (v7x)
            vmem_limit_bytes=32 * 1024 * 1024,   # explicit, safe on v5e/v6e/v7x
        ),
        cost_estimate=cost,
    )(e_pad, wt_p, b_p)

    # Strip padding only when present (skip the extra slice when aligned).
    logits = logits_pad if V_pad == V else logits_pad[:, :V]
    e = e_pad if E_pad == E else e_pad[:, :E]
    return logits, e


if __name__ == "__main__":
    # Small shapes consistent with the module: vocab_size=16, embedding_size=2, batch=8.
    V, E, B = 16, 2, 8

    key = jax.random.PRNGKey(0)
    k_emb, k_w, k_b, k_x = jax.random.split(key, 4)

    # Deterministic init matching PyTorch distributions:
    #   nn.Embedding.weight ~ N(0, 1)
    #   nn.Linear.weight/bias ~ U(-1/sqrt(in_features), 1/sqrt(in_features))
    emb = jax.random.normal(k_emb, (V, E), dtype=jnp.float32)
    bound = 1.0 / jnp.sqrt(jnp.float32(E))
    w = jax.random.uniform(k_w, (V, E), minval=-bound, maxval=bound, dtype=jnp.float32)
    b = jax.random.uniform(k_b, (V,), minval=-bound, maxval=bound, dtype=jnp.float32)

    x = jax.random.randint(k_x, (B,), 0, V, dtype=jnp.int32)

    params, dims = prepare_params(emb, w, b)   # one-time transpose/pad/quantize
    logits, e = word2vec_forward(x, params, dims)
    jax.block_until_ready((logits, e))

    # References: exact f32 embedding; linear checked against both the
    # bf16-weight numerics the kernel uses (tight) and pure f32 (loose).
    e_ref = emb[x]
    logits_f32 = e_ref @ w.T + b
    logits_bf16 = (e_ref.astype(jnp.bfloat16).astype(jnp.float32)
                   @ w.astype(jnp.bfloat16).astype(jnp.float32).T + b)

    assert logits.shape == (B, V) and e.shape == (B, E)
    assert jnp.allclose(e, e_ref, atol=1e-6, rtol=1e-6)
    assert jnp.allclose(logits, logits_bf16, atol=1e-4, rtol=1e-4)
    assert jnp.allclose(logits, logits_f32, atol=2e-2, rtol=2e-2)

    print("KERNEL_OK")
</pallas_src>

<mosaic_0001>
module attributes {stable_mosaic.version = 11 : i64} {
  func.func @_gather_vmem_kernel(%arg0: memref<8xi32, #tpu.memory_space<smem>>, %arg1: memref<16x128xf32, #tpu.memory_space<vmem>>, %arg2: memref<8x128xf32, #tpu.memory_space<vmem>>) attributes {dimension_semantics = [], scalar_prefetch = 0 : i64, scratch_operands = 0 : i64, tpu.core_type = #tpu.core_type<tc>} {
    %c0 = arith.constant 0 : index
    %0 = memref.load %arg0[%c0] : memref<8xi32, #tpu.memory_space<smem>>
    %1 = arith.index_cast %0 : i32 to index
    %c0_0 = arith.constant 0 : index
    %2 = vector.load %arg1[%1, %c0_0] : memref<16x128xf32, #tpu.memory_space<vmem>>, vector<1x128xf32>
    %3 = vector.shape_cast %2 : vector<1x128xf32> to vector<128xf32>
    %c0_1 = arith.constant 0 : index
    %c0_2 = arith.constant 0 : index
    %4 = vector.load %arg2[%c0_1, %c0_2] : memref<8x128xf32, #tpu.memory_space<vmem>>, vector<1x128xf32>
    %5 = vector.shape_cast %4 : vector<1x128xf32> to vector<128xf32>
    %6 = vector.shape_cast %3 : vector<128xf32> to vector<1x128xf32>
    tpu.vector_store %arg2[%c0_1, %c0_2], %6 {strides = array<i32>} : memref<8x128xf32, #tpu.memory_space<vmem>>, vector<1x128xf32>,
    %c1 = arith.constant 1 : index
    %7 = memref.load %arg0[%c1] : memref<8xi32, #tpu.memory_space<smem>>
    %8 = arith.index_cast %7 : i32 to index
    %c0_3 = arith.constant 0 : index
    %9 = vector.load %arg1[%8, %c0_3] : memref<16x128xf32, #tpu.memory_space<vmem>>, vector<1x128xf32>
    %10 = vector.shape_cast %9 : vector<1x128xf32> to vector<128xf32>
    %c1_4 = arith.constant 1 : index
    %c0_5 = arith.constant 0 : index
    %11 = vector.load %arg2[%c1_4, %c0_5] : memref<8x128xf32, #tpu.memory_space<vmem>>, vector<1x128xf32>
    %12 = vector.shape_cast %11 : vector<1x128xf32> to vector<128xf32>
    %13 = vector.shape_cast %10 : vector<128xf32> to vector<1x128xf32>
    tpu.vector_store %arg2[%c1_4, %c0_5], %13 {strides = array<i32>} : memref<8x128xf32, #tpu.memory_space<vmem>>, vector<1x128xf32>,
    %c2 = arith.constant 2 : index
    %14 = memref.load %arg0[%c2] : memref<8xi32, #tpu.memory_space<smem>>
    %15 = arith.index_cast %14 : i32 to index
    %c0_6 = arith.constant 0 : index
    %16 = vector.load %arg1[%15, %c0_6] : memref<16x128xf32, #tpu.memory_space<vmem>>, vector<1x128xf32>
    %17 = vector.shape_cast %16 : vector<1x128xf32> to vector<128xf32>
    %c2_7 = arith.constant 2 : index
    %c0_8 = arith.constant 0 : index
    %18 = vector.load %arg2[%c2_7, %c0_8] : memref<8x128xf32, #tpu.memory_space<vmem>>, vector<1x128xf32>
    %19 = vector.shape_cast %18 : vector<1x128xf32> to vector<128xf32>
    %20 = vector.shape_cast %17 : vector<128xf32> to vector<1x128xf32>
    tpu.vector_store %arg2[%c2_7, %c0_8], %20 {strides = array<i32>} : memref<8x128xf32, #tpu.memory_space<vmem>>, vector<1x128xf32>,
    %c3 = arith.constant 3 : index
    %21 = memref.load %arg0[%c3] : memref<8xi32, #tpu.memory_space<smem>>
    %22 = arith.index_cast %21 : i32 to index
    %c0_9 = arith.constant 0 : index
    %23 = vector.load %arg1[%22, %c0_9] : memref<16x128xf32, #tpu.memory_space<vmem>>, vector<1x128xf32>
    %24 = vector.shape_cast %23 : vector<1x128xf32> to vector<128xf32>
    %c3_10 = arith.constant 3 : index
    %c0_11 = arith.constant 0 : index
    %25 = vector.load %arg2[%c3_10, %c0_11] : memref<8x128xf32, #tpu.memory_space<vmem>>, vector<1x128xf32>
    %26 = vector.shape_cast %25 : vector<1x128xf32> to vector<128xf32>
    %27 = vector.shape_cast %24 : vector<128xf32> to vector<1x128xf32>
    tpu.vector_store %arg2[%c3_10, %c0_11], %27 {strides = array<i32>} : memref<8x128xf32, #tpu.memory_space<vmem>>, vector<1x128xf32>,
    %c4 = arith.constant 4 : index
    %28 = memref.load %arg0[%c4] : memref<8xi32, #tpu.memory_space<smem>>
    %29 = arith.index_cast %28 : i32 to index
    %c0_12 = arith.constant 0 : index
    %30 = vector.load %arg1[%29, %c0_12] : memref<16x128xf32, #tpu.memory_space<vmem>>, vector<1x128xf32>
    %31 = vector.shape_cast %30 : vector<1x128xf32> to vector<128xf32>
    %c4_13 = arith.constant 4 : index
    %c0_14 = arith.constant 0 : index
    %32 = vector.load %arg2[%c4_13, %c0_14] : memref<8x128xf32, #tpu.memory_space<vmem>>, vector<1x128xf32>
    %33 = vector.shape_cast %32 : vector<1x128xf32> to vector<128xf32>
    %34 = vector.shape_cast %31 : vector<128xf32> to vector<1x128xf32>
    tpu.vector_store %arg2[%c4_13, %c0_14], %34 {strides = array<i32>} : memref<8x128xf32, #tpu.memory_space<vmem>>, vector<1x128xf32>,
    %c5 = arith.constant 5 : index
    %35 = memref.load %arg0[%c5] : memref<8xi32, #tpu.memory_space<smem>>
    %36 = arith.index_cast %35 : i32 to index
    %c0_15 = arith.constant 0 : index
    %37 = vector.load %arg1[%36, %c0_15] : memref<16x128xf32, #tpu.memory_space<vmem>>, vector<1x128xf32>
    %38 = vector.shape_cast %37 : vector<1x128xf32> to vector<128xf32>
    %c5_16 = arith.constant 5 : index
    %c0_17 = arith.constant 0 : index
    %39 = vector.load %arg2[%c5_16, %c0_17] : memref<8x128xf32, #tpu.memory_space<vmem>>, vector<1x128xf32>
    %40 = vector.shape_cast %39 : vector<1x128xf32> to vector<128xf32>
    %41 = vector.shape_cast %38 : vector<128xf32> to vector<1x128xf32>
    tpu.vector_store %arg2[%c5_16, %c0_17], %41 {strides = array<i32>} : memref<8x128xf32, #tpu.memory_space<vmem>>, vector<1x128xf32>,
    %c6 = arith.constant 6 : index
    %42 = memref.load %arg0[%c6] : memref<8xi32, #tpu.memory_space<smem>>
    %43 = arith.index_cast %42 : i32 to index
    %c0_18 = arith.constant 0 : index
    %44 = vector.load %arg1[%43, %c0_18] : memref<16x128xf32, #tpu.memory_space<vmem>>, vector<1x128xf32>
    %45 = vector.shape_cast %44 : vector<1x128xf32> to vector<128xf32>
    %c6_19 = arith.constant 6 : index
    %c0_20 = arith.constant 0 : index
    %46 = vector.load %arg2[%c6_19, %c0_20] : memref<8x128xf32, #tpu.memory_space<vmem>>, vector<1x128xf32>
    %47 = vector.shape_cast %46 : vector<1x128xf32> to vector<128xf32>
    %48 = vector.shape_cast %45 : vector<128xf32> to vector<1x128xf32>
    tpu.vector_store %arg2[%c6_19, %c0_20], %48 {strides = array<i32>} : memref<8x128xf32, #tpu.memory_space<vmem>>, vector<1x128xf32>,
    %c7 = arith.constant 7 : index
    %49 = memref.load %arg0[%c7] : memref<8xi32, #tpu.memory_space<smem>>
    %50 = arith.index_cast %49 : i32 to index
    %c0_21 = arith.constant 0 : index
    %51 = vector.load %arg1[%50, %c0_21] : memref<16x128xf32, #tpu.memory_space<vmem>>, vector<1x128xf32>
    %52 = vector.shape_cast %51 : vector<1x128xf32> to vector<128xf32>
    %c7_22 = arith.constant 7 : index
    %c0_23 = arith.constant 0 : index
    %53 = vector.load %arg2[%c7_22, %c0_23] : memref<8x128xf32, #tpu.memory_space<vmem>>, vector<1x128xf32>
    %54 = vector.shape_cast %53 : vector<1x128xf32> to vector<128xf32>
    %55 = vector.shape_cast %52 : vector<128xf32> to vector<1x128xf32>
    tpu.vector_store %arg2[%c7_22, %c0_23], %55 {strides = array<i32>} : memref<8x128xf32, #tpu.memory_space<vmem>>, vector<1x128xf32>,
    return
  }
}

</mosaic_0001>

<llo_original>
// kernel: tpu_custom_call.1
$region0: #{tpu_custom_call.1}
  #allocation0 [shape = 'u32[]', space=smem, size = 0x4, offset = 0x4, fixed_abs, tag = 'smem constant byte address 0x4 - core index']
  #allocation1 [shape = 'u32[144,128]{1,0:T(1,128)}', space=vmem, size = 0x12000, scoped, tag = 'internal scratch']
  %s0 = inlined_call_operand.hbm [shape: s32[8], index: 0, kind: input, shape index: {}]
  %s1 = inlined_call_operand.hbm [shape: f32[16,128], index: 1, kind: input, shape index: {}]
  %s2 = inlined_call_operand.hbm [shape: f32[8,128], index: 2, kind: output, shape index: {}]
  %s3 = sld [smem:[#allocation0]]
  $region26: #{tpu_custom_call.1} parent=0
    _
  %s5 = ssub.s32 1, %s3
  %s6 = scalar_select 0, %s5, %s3
  $region1: #{tpu_custom_call.1} parent=0
    #allocation2 [shape = 'u8[512]{0}', space=smem, size = 0x200, scoped, tag = 'input window, operand 0, single buffered']
    #allocation3 [shape = 's32[1]{0}', space=sflag, size = 0x4, scoped, tag = 'scoped memory for tpu_custom_call.1']
    #allocation4 [shape = 's32[1]{0}', space=sflag, size = 0x4, scoped, tag = 'scoped memory for tpu_custom_call.1']
    #allocation5 [shape = 's32[1]{0}', space=sflag, size = 0x4, scoped, tag = 'scoped memory for tpu_custom_call.1']
    #allocation6 [shape = 'u8[8192]{0}', space=vmem, size = 0x2000, scoped, tag = 'input window, operand 1, single buffered']
    #allocation7 [shape = 'u8[4096]{0}', space=vmem, size = 0x1000, scoped, tag = 'output window, operand 0, single buffered']
    %7 = vsyncpa [#allocation5], 0
    %8 = vsyncpa [#allocation3], 0
    %9 = vsyncpa [#allocation4], 0
    // Predicated region
    $region2: #{tpu_custom_call.1} parent=1 // pred_check
      _
    $region3: #{tpu_custom_call.1} parent=1 // pred_check_branch
      %11 = sbr.rel (0) target = $region5
    $region4: #{tpu_custom_call.1} parent=1 // pred_region
      %s13 = ssub.s32 16, 16
      %14 = vsyncadd [#allocation5], %s13
      %17 = dma.hbm_to_smem %s0, 16, [#allocation2], [#allocation5]
    $region5: #{tpu_custom_call.1} parent=1 // pred_fallthru
      _
    // Predicated region
    $region6: #{tpu_custom_call.1} parent=1 // pred_check
      _
    $region7: #{tpu_custom_call.1} parent=1 // pred_check_branch
      %19 = sbr.rel (0) target = $region9
    $region8: #{tpu_custom_call.1} parent=1 // pred_region
      %s21 = ssub.s32 256, 256
      %22 = vsyncadd [#allocation3], %s21
      %s23 = sshll.u32 [#allocation6], 4
      %s24 = int_to_ptr.vmem [resolvable:$true] %s23
      %29 = dma.hbm_to_vmem [thread:$0]  %s1, 256, %s24, [#allocation3], 128, 128, 8
    $region9: #{tpu_custom_call.1} parent=1 // pred_fallthru
      _
    // Predicated region
    $region10: #{tpu_custom_call.1} parent=1 // pred_check
      _
    $region11: #{tpu_custom_call.1} parent=1 // pred_check_branch
      %31 = sbr.rel (0) target = $region13
    $region12: #{tpu_custom_call.1} parent=1 // pred_region
      %32 = dma.done [#allocation5], 16
    $region13: #{tpu_custom_call.1} parent=1 // pred_fallthru
      _
    // Predicated region
    $region14: #{tpu_custom_call.1} parent=1 // pred_check
      _
    $region15: #{tpu_custom_call.1} parent=1 // pred_check_branch
      %34 = sbr.rel (0) target = $region17
    $region16: #{tpu_custom_call.1} parent=1 // pred_region
      %35 = dma.done [#allocation3], 256
    $region17: #{tpu_custom_call.1} parent=1 // pred_fallthru
      _
    %36 = sfence
    %s37 = sld [smem:[#allocation2]]
    %s38 = scalar_lea.vmem [#allocation6], %s37
    %v39 = vld [vmem:[%s38] sm:$0x1]
    %40 = vst [vmem:[#allocation7] sm:$0x1] %v39
    %s41 = sld [smem:[#allocation2 + $0x1]]
    %s42 = scalar_lea.vmem [#allocation6], %s41
    %v43 = vld [vmem:[%s42] sm:$0x1]
    %44 = vst [vmem:[#allocation7 + $0x1] sm:$0x1] %v43
    %s45 = sld [smem:[#allocation2 + $0x2]]
    %s46 = scalar_lea.vmem [#allocation6], %s45
    %v47 = vld [vmem:[%s46] sm:$0x1]
    %48 = vst [vmem:[#allocation7 + $0x2] sm:$0x1] %v47
    %s49 = sld [smem:[#allocation2 + $0x3]]
    %s50 = scalar_lea.vmem [#allocation6], %s49
    %v51 = vld [vmem:[%s50] sm:$0x1]
    %52 = vst [vmem:[#allocation7 + $0x3] sm:$0x1] %v51
    %s53 = sld [smem:[#allocation2 + $0x4]]
    %s54 = scalar_lea.vmem [#allocation6], %s53
    %v55 = vld [vmem:[%s54] sm:$0x1]
    %56 = vst [vmem:[#allocation7 + $0x4] sm:$0x1] %v55
    %s57 = sld [smem:[#allocation2 + $0x5]]
    %s58 = scalar_lea.vmem [#allocation6], %s57
    %v59 = vld [vmem:[%s58] sm:$0x1]
    %60 = vst [vmem:[#allocation7 + $0x5] sm:$0x1] %v59
    %s61 = sld [smem:[#allocation2 + $0x6]]
    %s62 = scalar_lea.vmem [#allocation6], %s61
    %v63 = vld [vmem:[%s62] sm:$0x1]
    %64 = vst [vmem:[#allocation7 + $0x6] sm:$0x1] %v63
    %s65 = sld [smem:[#allocation2 + $0x7]]
    %s66 = scalar_lea.vmem [#allocation6], %s65
    %v67 = vld [vmem:[%s66] sm:$0x1]
    %68 = vst [vmem:[#allocation7 + $0x7] sm:$0x1] %v67
    // Predicated region
    $region18: #{tpu_custom_call.1} parent=1 // pred_check
      _
    $region19: #{tpu_custom_call.1} parent=1 // pred_check_branch
      %70 = sbr.rel (0) target = $region21
    $region20: #{tpu_custom_call.1} parent=1 // pred_region
      %s72 = ssub.s32 128, 128
      %73 = vsyncadd [#allocation4], %s72
      %s75 = sshll.u32 [#allocation7], 4
      %s76 = int_to_ptr.vmem [resolvable:$true] %s75
      %78 = dma.vmem_to_hbm [thread:$0]  %s76, 128, %s2, [#allocation4]
    $region21: #{tpu_custom_call.1} parent=1 // pred_fallthru
      _
    // Predicated region
    $region22: #{tpu_custom_call.1} parent=1 // pred_check
      _
    $region23: #{tpu_custom_call.1} parent=1 // pred_check_branch
      %80 = sbr.rel (0) target = $region25
    $region24: #{tpu_custom_call.1} parent=1 // pred_region
      %81 = dma.done [#allocation4], 128
    $region25: #{tpu_custom_call.1} parent=1 // pred_fallthru
      _
    %82 = vsyncpa [#allocation3], 1
    %83 = vsyncpa [#allocation4], 1
    %84 = vsyncpa [#allocation5], 1

</llo_original>
